<compile_context>
chip_gen: v7x
topology: tpu7x:2x2x1
jax: 0.10.0
libtpu: 0.0.40
codegen_flags: <defaults>
</compile_context>

<pallas_src>
import numpy as np
import jax
import jax.numpy as jnp
from jax.experimental import pallas as pl
from jax.experimental.pallas import tpu as pltpu


def _round_up(x, m):
    return (x + m - 1) // m * m


def _trl_kernel(x_ref, w1_ref, w2_ref, bias_ref, o_ref, h_acc):
    """One (batch tile, feature tile) grid step.

    x_ref   : (TB, TF)   activation tile (caller dtype: f32 or bf16)
    w1_ref  : (TF, K1)   streamed folded factor tile, K1 = min(prod(in_ranks), r_out)
    w2_ref  : (K1, L)    resident small weight
    bias_ref: (1,) SMEM  scalar bias
    o_ref   : (TB, L)
    h_acc   : (TB, K1) f32 VMEM accumulator, persists across the feature axis
    """
    f = pl.program_id(1)

    @pl.when(f == 0)
    def _():
        h_acc[...] = jnp.zeros_like(h_acc)

    # Stage 1 (the only data-proportional contraction): accumulate x @ W1.
    h_acc[...] += jnp.dot(x_ref[...], w1_ref[...],
                          preferred_element_type=jnp.float32)

    @pl.when(f == pl.num_programs(1) - 1)
    def _():
        # Stage 2 on the VMEM-resident intermediate + bias fold: no HBM
        # round-trip for h, single tiny MXU push.
        out = jnp.dot(h_acc[...], w2_ref[...], preferred_element_type=jnp.float32)
        o_ref[...] = (out + bias_ref[0]).astype(o_ref.dtype)


def prepare_tucker_trl_weights(core, factors, weight_dtype=jnp.bfloat16):
    """Batch-independent weight prep.  Call ONCE per weight update and cache
    the result; re-running it per forward call is pure overhead."""
    *U_in, U_out = factors
    ranks_in = [int(u.shape[1]) for u in U_in]
    R = int(np.prod(ranks_in))
    L, r_out = U_out.shape
    assert core.shape == tuple(ranks_in) + (r_out,)

    # kron(U1, ..., Un): kf[flat(i1..in), flat(a1..an)] = prod_k U_k[i_k, a_k]
    # (row-major flatten, matching x.reshape(B, -1)).
    kf = U_in[0].astype(jnp.float32)
    for u in U_in[1:]:
        kf = jnp.einsum('ia,jb->ijab', kf, u.astype(jnp.float32)).reshape(
            kf.shape[0] * u.shape[0], kf.shape[1] * u.shape[1])
    core_mat = core.reshape(R, r_out).astype(jnp.float32)
    u_out_t = U_out.T.astype(jnp.float32)                       # (r_out, L)

    if r_out <= R:
        w1 = kf @ core_mat        # (F, r_out) — fold core into streamed factor
        w2 = u_out_t              # (r_out, L)
    else:
        w1 = kf                   # (F, R)
        w2 = core_mat @ u_out_t   # (R, L)   — fold core into finalize weight
    return w1.astype(weight_dtype), w2


def tucker_trl_apply(x, w1, w2, bias, *, batch_tile=256, feat_tile=2048):
    """Fused forward:  out = (x.reshape(B, F) @ w1) @ w2 + bias."""
    B = int(x.shape[0])
    F = int(np.prod(x.shape[1:]))
    assert int(w1.shape[0]) == F
    K1 = int(w1.shape[1])
    assert int(w2.shape[0]) == K1
    L = int(w2.shape[1])

    x2d = x.reshape(B, F)                         # stream in caller dtype; no cast pass
    bias_s = jnp.asarray(bias, jnp.float32).reshape(1)

    # --- feature (reduction) tiling: TF multiple of 128 dividing F_pad -------
    F_pad = _round_up(F, 128)
    tf_cap = max(128, min(_round_up(feat_tile, 128), F_pad))
    TF = 128
    for cand in range(tf_cap, 127, -128):
        if F_pad % cand == 0:
            TF = cand
            break
    if F_pad != F:
        # Uncommon (flattened mode dims not 128-aligned): pad x once; padded
        # W1 rows are zero so the extra columns contribute exactly 0.
        x2d = jnp.pad(x2d, ((0, 0), (0, F_pad - F)))
        w1 = jnp.pad(w1, ((0, F_pad - F), (0, 0)))

    # --- batch tiling: multiple of 8; partial last block handled by Pallas ---
    TB = _round_up(min(batch_tile, B), 8)
    if pl.cdiv(B, TB) < 2 and B > 8:
        # v7x has 2 TensorCores; only the "parallel" batch axis is sharded
        # across them, so guarantee at least two batch blocks when possible.
        TB = _round_up(pl.cdiv(B, 2), 8)

    grid = (pl.cdiv(B, TB), F_pad // TF)

    # VMEM budget: double-buffered x/W1 tiles + out + f32 accumulator
    # (small dims lane-pad to 128).  Cap with headroom under v7x's 64 MiB.
    vmem_est = (2 * TB * TF * x2d.dtype.itemsize
                + 2 * TF * max(K1, 128) * w1.dtype.itemsize
                + 2 * TB * max(L, 128) * 4
                + TB * max(K1, 128) * 4)
    vmem_limit = int(min(48 * 1024 * 1024,
                         max(32 * 1024 * 1024, 2 * vmem_est)))

    out = pl.pallas_call(
        _trl_kernel,
        out_shape=jax.ShapeDtypeStruct((B, L), jnp.float32),
        grid_spec=pltpu.PrefetchScalarGridSpec(
            num_scalar_prefetch=0,
            grid=grid,
            in_specs=[
                pl.BlockSpec((TB, TF), lambda b, f: (b, f)),        # x tile (lane-dense)
                pl.BlockSpec((TF, K1), lambda b, f: (f, 0)),        # W1 tile
                pl.BlockSpec((K1, L), lambda b, f: (0, 0)),         # W2 (resident)
                pl.BlockSpec(memory_space=pltpu.MemorySpace.SMEM),  # scalar bias
            ],
            out_specs=pl.BlockSpec((TB, L), lambda b, f: (b, 0)),
            scratch_shapes=[pltpu.VMEM((TB, K1), jnp.float32)],
        ),
        compiler_params=pltpu.CompilerParams(
            dimension_semantics=("parallel", "arbitrary"),
            vmem_limit_bytes=vmem_limit,
        ),
        # TODO(synk): sweep pipeline_mode=pl.Buffered(3) on the x/W1 specs on
        # v7x (DMA-latency bound regime); default double-buffering kept here.
    )(x2d, w1, w2, bias_s)

    return out


def tucker_trl_forward(x, core, factors, bias, *, batch_tile=256, feat_tile=2048,
                       weight_dtype=jnp.bfloat16):
    """Convenience wrapper.  For inference, call prepare_tucker_trl_weights
    once and reuse tucker_trl_apply instead of re-preparing every call."""
    w1, w2 = prepare_tucker_trl_weights(core, factors, weight_dtype=weight_dtype)
    return tucker_trl_apply(x, w1, w2, bias,
                            batch_tile=batch_tile, feat_tile=feat_tile)


# ----------------------- pure-JAX reference for validation -------------------
def _tucker_to_tensor(core, factors):
    w = core
    for i, u in enumerate(factors):
        w = jnp.moveaxis(jnp.tensordot(u, w, axes=(1, i)), 0, i)
    return w


def tucker_trl_ref(x, core, factors, bias):
    w = _tucker_to_tensor(core, factors)                 # (m1, ..., mn, L)
    n = x.ndim - 1
    out = jnp.tensordot(x, w, axes=(list(range(1, x.ndim)), list(range(n))))
    return out + bias


if __name__ == "__main__":
    # Tucker_TRL(input_size=(2, 4, 16, 16), output_size=(2, 10), ranks=(3, 3, 3, 3))
    B, m1, m2, m3 = 2, 4, 16, 16
    L = 10
    ranks = (3, 3, 3, 3)

    key = jax.random.PRNGKey(0)
    kx, kc, k1, k2, k3, k4, kb = jax.random.split(key, 7)
    x = jax.random.normal(kx, (B, m1, m2, m3), jnp.float32)
    # module init: core / factors ~ U(-0.1, 0.1); bias is a learnable scalar.
    core = jax.random.uniform(kc, ranks, jnp.float32, -0.1, 0.1)
    factors = [
        jax.random.uniform(k1, (m1, ranks[0]), jnp.float32, -0.1, 0.1),
        jax.random.uniform(k2, (m2, ranks[1]), jnp.float32, -0.1, 0.1),
        jax.random.uniform(k3, (m3, ranks[2]), jnp.float32, -0.1, 0.1),
        jax.random.uniform(k4, (L, ranks[3]), jnp.float32, -0.1, 0.1),
    ]
    bias = jax.random.normal(kb, (), jnp.float32) * 0.1   # exercise the bias add

    out = tucker_trl_forward(x, core, factors, bias)
    out = jax.block_until_ready(out)

    ref = tucker_trl_ref(x, core, factors, bias)
    assert out.shape == ref.shape == (B, L), out.shape
    max_err = float(jnp.max(jnp.abs(out - ref)))
    # Streamed weights are bf16 (f32 accumulation), so use a bf16-appropriate
    # tolerance; the f32 x path keeps the error far below this bound anyway.
    tol = 1e-3 + 1e-2 * float(jnp.max(jnp.abs(ref)))
    assert max_err < tol, f"mismatch vs reference: {max_err} (tol {tol})"

    print("KERNEL_OK")
</pallas_src>

<mosaic_0001>
module attributes {stable_mosaic.version = 11 : i64} {
  func.func @_trl_kernel(%arg0: i32, %arg1: i32, %arg2: memref<8x1024xf32, #tpu.memory_space<vmem>>, %arg3: memref<1024x3xbf16, #tpu.memory_space<vmem>>, %arg4: memref<3x10xf32, #tpu.memory_space<vmem>>, %arg5: memref<1xf32, #tpu.memory_space<smem>>, %arg6: memref<8x10xf32, #tpu.memory_space<vmem>>, %arg7: memref<8x3xf32, #tpu.memory_space<vmem>>) attributes {dimension_semantics = [#tpu.dimension_semantics<parallel>, #tpu.dimension_semantics<arbitrary>], iteration_bounds = array<i64: 1, 1>, scalar_prefetch = 0 : i64, scratch_operands = 1 : i64, tpu.core_type = #tpu.core_type<tc>, window_params = [{transform_indices = @transform_0, window_bounds = array<i64: 8, 1024>}, {transform_indices = @transform_1, window_bounds = array<i64: 1024, 3>}, {pipeline_mode = #tpu.pipeline_mode<synchronous>, transform_indices = @transform_2, window_bounds = array<i64: 3, 10>}, {transform_indices = @transform_3, window_bounds = array<i64: 1>}, {transform_indices = @transform_4, window_bounds = array<i64: 8, 10>}]} {
    %c0_i32 = arith.constant 0 : i32
    %0 = arith.cmpi eq, %arg1, %c0_i32 : i32
    %1 = arith.extui %0 : i1 to i32
    %c0_i32_0 = arith.constant 0 : i32
    %2 = arith.cmpi ne, %1, %c0_i32_0 : i32
    scf.if %2 {
      %cst_10 = arith.constant 0.000000e+00 : f32
      %12 = vector.broadcast %cst_10 : f32 to vector<8x3xf32>
      %c0_11 = arith.constant 0 : index
      %c0_12 = arith.constant 0 : index
      %13 = vector.load %arg7[%c0_11, %c0_12] : memref<8x3xf32, #tpu.memory_space<vmem>>, vector<8x3xf32>
      tpu.vector_store %arg7[%c0_11, %c0_12], %12 {strides = array<i32>} : memref<8x3xf32, #tpu.memory_space<vmem>>, vector<8x3xf32>,
    } else {
    }
    %c0 = arith.constant 0 : index
    %c0_1 = arith.constant 0 : index
    %3 = vector.load %arg7[%c0, %c0_1] : memref<8x3xf32, #tpu.memory_space<vmem>>, vector<8x3xf32>
    %c0_2 = arith.constant 0 : index
    %c0_3 = arith.constant 0 : index
    %4 = vector.load %arg2[%c0_2, %c0_3] : memref<8x1024xf32, #tpu.memory_space<vmem>>, vector<8x1024xf32>
    %c0_4 = arith.constant 0 : index
    %c0_5 = arith.constant 0 : index
    %5 = vector.load %arg3[%c0_4, %c0_5] : memref<1024x3xbf16, #tpu.memory_space<vmem>>, vector<1024x3xbf16>
    %cst = arith.constant dense<0.000000e+00> : vector<8x3xf32>
    %6 = tpu.matmul %4, %5, %cst {dimension_numbers = #tpu.dot_dimension_numbers<[1], [0], [0], [1], [0, 0, 1, 1], [], []>} : vector<8x1024xf32>, vector<1024x3xbf16>, vector<8x3xf32> -> vector<8x3xf32>
    %7 = arith.addf %3, %6 : vector<8x3xf32>
    %c0_6 = arith.constant 0 : index
    %c0_7 = arith.constant 0 : index
    %8 = vector.load %arg7[%c0_6, %c0_7] : memref<8x3xf32, #tpu.memory_space<vmem>>, vector<8x3xf32>
    tpu.vector_store %arg7[%c0_6, %c0_7], %7 {strides = array<i32>} : memref<8x3xf32, #tpu.memory_space<vmem>>, vector<8x3xf32>,
    %c0_i32_8 = arith.constant 0 : i32
    %9 = arith.cmpi eq, %arg1, %c0_i32_8 : i32
    %10 = arith.extui %9 : i1 to i32
    %c0_i32_9 = arith.constant 0 : i32
    %11 = arith.cmpi ne, %10, %c0_i32_9 : i32
    scf.if %11 {
      %c0_10 = arith.constant 0 : index
      %c0_11 = arith.constant 0 : index
      %12 = vector.load %arg7[%c0_10, %c0_11] : memref<8x3xf32, #tpu.memory_space<vmem>>, vector<8x3xf32>
      %c0_12 = arith.constant 0 : index
      %c0_13 = arith.constant 0 : index
      %13 = vector.load %arg4[%c0_12, %c0_13] : memref<3x10xf32, #tpu.memory_space<vmem>>, vector<3x10xf32>
      %cst_14 = arith.constant dense<0.000000e+00> : vector<8x10xf32>
      %14 = tpu.matmul %12, %13, %cst_14 {dimension_numbers = #tpu.dot_dimension_numbers<[1], [0], [0], [1], [0, 0, 1, 1], [], []>} : vector<8x3xf32>, vector<3x10xf32>, vector<8x10xf32> -> vector<8x10xf32>
      %c0_15 = arith.constant 0 : index
      %15 = memref.load %arg5[%c0_15] : memref<1xf32, #tpu.memory_space<smem>>
      %16 = vector.broadcast %15 : f32 to vector<8x10xf32>
      %17 = arith.addf %14, %16 : vector<8x10xf32>
      %c0_16 = arith.constant 0 : index
      %c0_17 = arith.constant 0 : index
      %18 = vector.load %arg6[%c0_16, %c0_17] : memref<8x10xf32, #tpu.memory_space<vmem>>, vector<8x10xf32>
      tpu.vector_store %arg6[%c0_16, %c0_17], %17 {strides = array<i32>} : memref<8x10xf32, #tpu.memory_space<vmem>>, vector<8x10xf32>,
    } else {
    }
    return
  }
  func.func @transform_0(%arg0: i32, %arg1: i32) -> (i32, i32) {
    %c0_i32 = arith.constant 0 : i32
    return %arg0, %arg1 : i32, i32
  }
  func.func @transform_1(%arg0: i32, %arg1: i32) -> (i32, i32) {
    %c0_i32 = arith.constant 0 : i32
    %c0_i32_0 = arith.constant 0 : i32
    return %arg1, %c0_i32 : i32, i32
  }
  func.func @transform_2(%arg0: i32, %arg1: i32) -> (i32, i32) {
    %c0_i32 = arith.constant 0 : i32
    %c0_i32_0 = arith.constant 0 : i32
    %c0_i32_1 = arith.constant 0 : i32
    return %c0_i32, %c0_i32_0 : i32, i32
  }
  func.func @transform_3(%arg0: i32, %arg1: i32) -> i32 {
    %c0_i32 = arith.constant 0 : i32
    %c0_i32_0 = arith.constant 0 : i32
    return %c0_i32 : i32
  }
  func.func @transform_4(%arg0: i32, %arg1: i32) -> (i32, i32) {
    %c0_i32 = arith.constant 0 : i32
    %c0_i32_0 = arith.constant 0 : i32
    return %arg0, %c0_i32 : i32, i32
  }
}

</mosaic_0001>

<llo_original>
// kernel: tpu_custom_call.1
$region0: #{tpu_custom_call.1}
  #allocation0 [shape = 'u32[]', space=smem, size = 0x4, offset = 0x4, fixed_abs, tag = 'smem constant byte address 0x4 - core index']
  #allocation1 [shape = 'u32[144,128]{1,0:T(1,128)}', space=vmem, size = 0x12000, scoped, tag = 'internal scratch']
  #allocation2 [shape = 'f32[8,3]{1,0:T(8,128)}', space=vmem, size = 0x1000, scoped, tag = 'scratch operand']
  #allocation3 [shape = 'f32[1]{0:T(128)S(6)}', space=smem, size = 0x200, scoped, tag = 'scoped memory for tpu_custom_call.1']
  %s0 = inlined_call_operand.vmem [shape: f32[2,1024], index: 0, kind: input, shape index: {}]
  %s1 = inlined_call_operand.vmem [shape: bf16[1024,3], index: 1, kind: input, shape index: {}]
  %s2 = inlined_call_operand.vmem [shape: f32[3,10], index: 2, kind: input, shape index: {}]
  %s3 = inlined_call_operand.<no memory space> [shape: f32[1], index: 3, kind: input, shape index: {}]
  %s4 = inlined_call_operand.hbm [shape: f32[2,10], index: 4, kind: output, shape index: {}]
  %s5 = sld [smem:[#allocation0]]
  $region34: #{tpu_custom_call.1} parent=0
    _
  %s7 = ssub.s32 1, %s5
  %s8 = scalar_select 0, %s7, %s5
  %9 = sst [smem:[#allocation3]] %s3
  $region1: #{tpu_custom_call.1} parent=0
    #allocation4 [shape = 'u8[4096]{0}', space=vmem, size = 0x1000, scoped, tag = 'output window, operand 0, single buffered']
    #allocation5 [shape = 's32[1]{0}', space=sflag, size = 0x4, scoped, tag = 'scoped memory for tpu_custom_call.1']
    %10 = vsyncpa [#allocation5], 0
    // Predicated region
    $region2: #{tpu_custom_call.1} parent=1 // pred_check
      _
    $region3: #{tpu_custom_call.1} parent=1 // pred_check_branch
      %12 = sbr.rel (0) target = $region5
    $region4: #{tpu_custom_call.1} parent=1 // pred_region
      _
    $region5: #{tpu_custom_call.1} parent=1 // pred_fallthru
      _
    // Predicated region
    $region6: #{tpu_custom_call.1} parent=1 // pred_check
      _
    $region7: #{tpu_custom_call.1} parent=1 // pred_check_branch
      %14 = sbr.rel (0) target = $region9
    $region8: #{tpu_custom_call.1} parent=1 // pred_region
      _
    $region9: #{tpu_custom_call.1} parent=1 // pred_fallthru
      _
    // Predicated region
    $region10: #{tpu_custom_call.1} parent=1 // pred_check
      _
    $region11: #{tpu_custom_call.1} parent=1 // pred_check_branch
      %16 = sbr.rel (0) target = $region13
    $region12: #{tpu_custom_call.1} parent=1 // pred_region
      _
    $region13: #{tpu_custom_call.1} parent=1 // pred_fallthru
      _
    // Predicated region
    $region14: #{tpu_custom_call.1} parent=1 // pred_check
      _
    $region15: #{tpu_custom_call.1} parent=1 // pred_check_branch
      %18 = sbr.rel (0) target = $region17
    $region16: #{tpu_custom_call.1} parent=1 // pred_region
      _
    $region17: #{tpu_custom_call.1} parent=1 // pred_fallthru
      _
    %p20 = scmp.eq.s32.totalorder 0, 0
    // Predicated region
    $region18: #{tpu_custom_call.1} parent=1 // pred_check
      %p21 = pneg %p20
    $region19: #{tpu_custom_call.1} parent=1 // pred_check_branch
      %23 = sbr.rel (%p21) target = $region21
    $region20: #{tpu_custom_call.1} parent=1 // pred_region
      %vm24 = vcmask 23552
      %25 = vst.msk [vmem:[#allocation2] sm:$0xff] %vm24, 0.0
    $region21: #{tpu_custom_call.1} parent=1 // pred_fallthru
      _
    %v26 = vld [vmem:[#allocation2] sm:$0xff]
    %v27 = vld [vmem:[%s0] sm:$0xff]
    %v28 = vld [vmem:[%s0 + $0x8] sm:$0xff]
    %v29 = vld [vmem:[%s0 + $0x10] sm:$0xff]
    %v30 = vld [vmem:[%s0 + $0x18] sm:$0xff]
    %v31 = vld [vmem:[%s0 + $0x20] sm:$0xff]
    %v32 = vld [vmem:[%s0 + $0x28] sm:$0xff]
    %v33 = vld [vmem:[%s0 + $0x30] sm:$0xff]
    %v34 = vld [vmem:[%s0 + $0x38] sm:$0xff]
    %v35 = vld [vmem:[%s1] sm:$0xf]
    %v36 = vld [vmem:[%s1 + $0x4] sm:$0xf]
    %v37 = vld [vmem:[%s1 + $0x8] sm:$0xf]
    %v38 = vld [vmem:[%s1 + $0xc] sm:$0xf]
    %v39 = vld [vmem:[%s1 + $0x10] sm:$0xf]
    %v40 = vld [vmem:[%s1 + $0x14] sm:$0xf]
    %v41 = vld [vmem:[%s1 + $0x18] sm:$0xf]
    %v42 = vld [vmem:[%s1 + $0x1c] sm:$0xf]
    %v43 = vld [vmem:[%s1 + $0x20] sm:$0xf]
    %v44 = vld [vmem:[%s1 + $0x24] sm:$0xf]
    %v45 = vld [vmem:[%s1 + $0x28] sm:$0xf]
    %v46 = vld [vmem:[%s1 + $0x2c] sm:$0xf]
    %v47 = vld [vmem:[%s1 + $0x30] sm:$0xf]
    %v48 = vld [vmem:[%s1 + $0x34] sm:$0xf]
    %v49 = vld [vmem:[%s1 + $0x38] sm:$0xf]
    %v50 = vld [vmem:[%s1 + $0x3c] sm:$0xf]
    %v51 = vld [vmem:[%s1 + $0x40] sm:$0xf]
    %v52 = vld [vmem:[%s1 + $0x44] sm:$0xf]
    %v53 = vld [vmem:[%s1 + $0x48] sm:$0xf]
    %v54 = vld [vmem:[%s1 + $0x4c] sm:$0xf]
    %v55 = vld [vmem:[%s1 + $0x50] sm:$0xf]
    %v56 = vld [vmem:[%s1 + $0x54] sm:$0xf]
    %v57 = vld [vmem:[%s1 + $0x58] sm:$0xf]
    %v58 = vld [vmem:[%s1 + $0x5c] sm:$0xf]
    %v59 = vld [vmem:[%s1 + $0x60] sm:$0xf]
    %v60 = vld [vmem:[%s1 + $0x64] sm:$0xf]
    %v61 = vld [vmem:[%s1 + $0x68] sm:$0xf]
    %v62 = vld [vmem:[%s1 + $0x6c] sm:$0xf]
    %v63 = vld [vmem:[%s1 + $0x70] sm:$0xf]
    %v64 = vld [vmem:[%s1 + $0x74] sm:$0xf]
    %v65 = vld [vmem:[%s1 + $0x78] sm:$0xf]
    %v66 = vld [vmem:[%s1 + $0x7c] sm:$0xf]
    %v67 = vld [vmem:[%s1 + $0x80] sm:$0xf]
    %v68 = vld [vmem:[%s1 + $0x84] sm:$0xf]
    %v69 = vld [vmem:[%s1 + $0x88] sm:$0xf]
    %v70 = vld [vmem:[%s1 + $0x8c] sm:$0xf]
    %v71 = vld [vmem:[%s1 + $0x90] sm:$0xf]
    %v72 = vld [vmem:[%s1 + $0x94] sm:$0xf]
    %v73 = vld [vmem:[%s1 + $0x98] sm:$0xf]
    %v74 = vld [vmem:[%s1 + $0x9c] sm:$0xf]
    %v75 = vld [vmem:[%s1 + $0xa0] sm:$0xf]
    %v76 = vld [vmem:[%s1 + $0xa4] sm:$0xf]
    %v77 = vld [vmem:[%s1 + $0xa8] sm:$0xf]
    %v78 = vld [vmem:[%s1 + $0xac] sm:$0xf]
    %v79 = vld [vmem:[%s1 + $0xb0] sm:$0xf]
    %v80 = vld [vmem:[%s1 + $0xb4] sm:$0xf]
    %v81 = vld [vmem:[%s1 + $0xb8] sm:$0xf]
    %v82 = vld [vmem:[%s1 + $0xbc] sm:$0xf]
    %v83 = vld [vmem:[%s1 + $0xc0] sm:$0xf]
    %v84 = vld [vmem:[%s1 + $0xc4] sm:$0xf]
    %v85 = vld [vmem:[%s1 + $0xc8] sm:$0xf]
    %v86 = vld [vmem:[%s1 + $0xcc] sm:$0xf]
    %v87 = vld [vmem:[%s1 + $0xd0] sm:$0xf]
    %v88 = vld [vmem:[%s1 + $0xd4] sm:$0xf]
    %v89 = vld [vmem:[%s1 + $0xd8] sm:$0xf]
    %v90 = vld [vmem:[%s1 + $0xdc] sm:$0xf]
    %v91 = vld [vmem:[%s1 + $0xe0] sm:$0xf]
    %v92 = vld [vmem:[%s1 + $0xe4] sm:$0xf]
    %v93 = vld [vmem:[%s1 + $0xe8] sm:$0xf]
    %v94 = vld [vmem:[%s1 + $0xec] sm:$0xf]
    %v95 = vld [vmem:[%s1 + $0xf0] sm:$0xf]
    %v96 = vld [vmem:[%s1 + $0xf4] sm:$0xf]
    %v97 = vld [vmem:[%s1 + $0xf8] sm:$0xf]
    %v98 = vld [vmem:[%s1 + $0xfc] sm:$0xf]
    %v99 = vld [vmem:[%s1 + $0x100] sm:$0xf]
    %v100 = vld [vmem:[%s1 + $0x104] sm:$0xf]
    %v101 = vld [vmem:[%s1 + $0x108] sm:$0xf]
    %v102 = vld [vmem:[%s1 + $0x10c] sm:$0xf]
    %v103 = vld [vmem:[%s1 + $0x110] sm:$0xf]
    %v104 = vld [vmem:[%s1 + $0x114] sm:$0xf]
    %v105 = vld [vmem:[%s1 + $0x118] sm:$0xf]
    %v106 = vld [vmem:[%s1 + $0x11c] sm:$0xf]
    %v107 = vld [vmem:[%s1 + $0x120] sm:$0xf]
    %v108 = vld [vmem:[%s1 + $0x124] sm:$0xf]
    %v109 = vld [vmem:[%s1 + $0x128] sm:$0xf]
    %v110 = vld [vmem:[%s1 + $0x12c] sm:$0xf]
    %v111 = vld [vmem:[%s1 + $0x130] sm:$0xf]
    %v112 = vld [vmem:[%s1 + $0x134] sm:$0xf]
    %v113 = vld [vmem:[%s1 + $0x138] sm:$0xf]
    %v114 = vld [vmem:[%s1 + $0x13c] sm:$0xf]
    %v115 = vld [vmem:[%s1 + $0x140] sm:$0xf]
    %v116 = vld [vmem:[%s1 + $0x144] sm:$0xf]
    %v117 = vld [vmem:[%s1 + $0x148] sm:$0xf]
    %v118 = vld [vmem:[%s1 + $0x14c] sm:$0xf]
    %v119 = vld [vmem:[%s1 + $0x150] sm:$0xf]
    %v120 = vld [vmem:[%s1 + $0x154] sm:$0xf]
    %v121 = vld [vmem:[%s1 + $0x158] sm:$0xf]
    %v122 = vld [vmem:[%s1 + $0x15c] sm:$0xf]
    %v123 = vld [vmem:[%s1 + $0x160] sm:$0xf]
    %v124 = vld [vmem:[%s1 + $0x164] sm:$0xf]
    %v125 = vld [vmem:[%s1 + $0x168] sm:$0xf]
    %v126 = vld [vmem:[%s1 + $0x16c] sm:$0xf]
    %v127 = vld [vmem:[%s1 + $0x170] sm:$0xf]
    %v128 = vld [vmem:[%s1 + $0x174] sm:$0xf]
    %v129 = vld [vmem:[%s1 + $0x178] sm:$0xf]
    %v130 = vld [vmem:[%s1 + $0x17c] sm:$0xf]
    %v131 = vld [vmem:[%s1 + $0x180] sm:$0xf]
    %v132 = vld [vmem:[%s1 + $0x184] sm:$0xf]
    %v133 = vld [vmem:[%s1 + $0x188] sm:$0xf]
    %v134 = vld [vmem:[%s1 + $0x18c] sm:$0xf]
    %v135 = vld [vmem:[%s1 + $0x190] sm:$0xf]
    %v136 = vld [vmem:[%s1 + $0x194] sm:$0xf]
    %v137 = vld [vmem:[%s1 + $0x198] sm:$0xf]
    %v138 = vld [vmem:[%s1 + $0x19c] sm:$0xf]
    %v139 = vld [vmem:[%s1 + $0x1a0] sm:$0xf]
    %v140 = vld [vmem:[%s1 + $0x1a4] sm:$0xf]
    %v141 = vld [vmem:[%s1 + $0x1a8] sm:$0xf]
    %v142 = vld [vmem:[%s1 + $0x1ac] sm:$0xf]
    %v143 = vld [vmem:[%s1 + $0x1b0] sm:$0xf]
    %v144 = vld [vmem:[%s1 + $0x1b4] sm:$0xf]
    %v145 = vld [vmem:[%s1 + $0x1b8] sm:$0xf]
    %v146 = vld [vmem:[%s1 + $0x1bc] sm:$0xf]
    %v147 = vld [vmem:[%s1 + $0x1c0] sm:$0xf]
    %v148 = vld [vmem:[%s1 + $0x1c4] sm:$0xf]
    %v149 = vld [vmem:[%s1 + $0x1c8] sm:$0xf]
    %v150 = vld [vmem:[%s1 + $0x1cc] sm:$0xf]
    %v151 = vld [vmem:[%s1 + $0x1d0] sm:$0xf]
    %v152 = vld [vmem:[%s1 + $0x1d4] sm:$0xf]
    %v153 = vld [vmem:[%s1 + $0x1d8] sm:$0xf]
    %v154 = vld [vmem:[%s1 + $0x1dc] sm:$0xf]
    %v155 = vld [vmem:[%s1 + $0x1e0] sm:$0xf]
    %v156 = vld [vmem:[%s1 + $0x1e4] sm:$0xf]
    %v157 = vld [vmem:[%s1 + $0x1e8] sm:$0xf]
    %v158 = vld [vmem:[%s1 + $0x1ec] sm:$0xf]
    %v159 = vld [vmem:[%s1 + $0x1f0] sm:$0xf]
    %v160 = vld [vmem:[%s1 + $0x1f4] sm:$0xf]
    %v161 = vld [vmem:[%s1 + $0x1f8] sm:$0xf]
    %v162 = vld [vmem:[%s1 + $0x1fc] sm:$0xf]
    %v171 = vcombine.low %v27, %v29
    %v172 = vcombine.high %v27, %v29
    %v173 = vcombine.low %v31, %v33
    %v174 = vcombine.high %v31, %v33
    %v176 = vunpack.c.l.s4 1983009808
    %v177 = vunpack.c.0.s8 %v176
    %v178 = vlaneseq
    %v179 = vshrl.u32 %v178, 7
    %v180 = vsub.s32 %v177, %v179
    %v181 = vrot.slane %v171, %v180
    %v183 = vunpack.c.l.s4 1983009808
    %v184 = vunpack.c.0.s8 %v183
    %v185 = vlaneseq
    %v186 = vshrl.u32 %v185, 7
    %v187 = vsub.s32 %v184, %v186
    %v188 = vrot.slane %v172, %v187
    %v190 = vunpack.c.l.s4 1983009808
    %v191 = vunpack.c.0.s8 %v190
    %v192 = vlaneseq
    %v193 = vshrl.u32 %v192, 7
    %v194 = vsub.s32 %v191, %v193
    %v195 = vrot.slane %v173, %v194
    %v197 = vunpack.c.l.s4 1983009808
    %v198 = vunpack.c.0.s8 %v197
    %v199 = vlaneseq
    %v200 = vshrl.u32 %v199, 7
    %v201 = vsub.s32 %v198, %v200
    %v202 = vrot.slane %v174, %v201
    %v203 = vcombine.low %v181, %v195
    %v204 = vcombine.high %v181, %v195
    %v205 = vcombine.low %v188, %v202
    %v206 = vcombine.high %v188, %v202
    %v207 = vcombine.low %v28, %v30
    %v208 = vcombine.high %v28, %v30
    %v209 = vcombine.low %v32, %v34
    %v210 = vcombine.high %v32, %v34
    %v212 = vunpack.c.l.s4 1983009808
    %v213 = vunpack.c.0.s8 %v212
    %v214 = vlaneseq
    %v215 = vshrl.u32 %v214, 7
    %v216 = vsub.s32 %v213, %v215
    %v217 = vrot.slane %v207, %v216
    %v219 = vunpack.c.l.s4 1983009808
    %v220 = vunpack.c.0.s8 %v219
    %v221 = vlaneseq
    %v222 = vshrl.u32 %v221, 7
    %v223 = vsub.s32 %v220, %v222
    %v224 = vrot.slane %v208, %v223
    %v226 = vunpack.c.l.s4 1983009808
    %v227 = vunpack.c.0.s8 %v226
    %v228 = vlaneseq
    %v229 = vshrl.u32 %v228, 7
    %v230 = vsub.s32 %v227, %v229
    %v231 = vrot.slane %v209, %v230
    %v233 = vunpack.c.l.s4 1983009808
    %v234 = vunpack.c.0.s8 %v233
    %v235 = vlaneseq
    %v236 = vshrl.u32 %v235, 7
    %v237 = vsub.s32 %v234, %v236
    %v238 = vrot.slane %v210, %v237
    %v239 = vcombine.low %v217, %v231
    %v240 = vcombine.high %v217, %v231
    %v241 = vcombine.low %v224, %v238
    %v242 = vcombine.high %v224, %v238
    %v379 = vunpack.c.l.b16 %v35
    %v380 = vunpack.c.l.b16 %v36
    %v381 = vunpack.c.l.b16 %v37
    %v382 = vunpack.c.l.b16 %v38
    %v383 = vunpack.c.l.b16 %v39
    %v384 = vunpack.c.l.b16 %v40
    %v385 = vunpack.c.l.b16 %v41
    %v386 = vunpack.c.l.b16 %v42
    %v387 = vunpack.c.l.b16 %v43
    %v388 = vunpack.c.l.b16 %v44
    %v389 = vunpack.c.l.b16 %v45
    %v390 = vunpack.c.l.b16 %v46
    %v391 = vunpack.c.l.b16 %v47
    %v392 = vunpack.c.l.b16 %v48
    %v393 = vunpack.c.l.b16 %v49
    %v394 = vunpack.c.l.b16 %v50
    %v395 = vunpack.c.l.b16 %v51
    %v396 = vunpack.c.l.b16 %v52
    %v397 = vunpack.c.l.b16 %v53
    %v398 = vunpack.c.l.b16 %v54
    %v399 = vunpack.c.l.b16 %v55
    %v400 = vunpack.c.l.b16 %v56
    %v401 = vunpack.c.l.b16 %v57
    %v402 = vunpack.c.l.b16 %v58
    %v403 = vunpack.c.l.b16 %v59
    %v404 = vunpack.c.l.b16 %v60
    %v405 = vunpack.c.l.b16 %v61
    %v406 = vunpack.c.l.b16 %v62
    %v407 = vunpack.c.l.b16 %v63
    %v408 = vunpack.c.l.b16 %v64
    %v409 = vunpack.c.l.b16 %v65
    %v410 = vunpack.c.l.b16 %v66
    %v411 = vunpack.c.l.b16 %v67
    %v412 = vunpack.c.l.b16 %v68
    %v413 = vunpack.c.l.b16 %v69
    %v414 = vunpack.c.l.b16 %v70
    %v415 = vunpack.c.l.b16 %v71
    %v416 = vunpack.c.l.b16 %v72
    %v417 = vunpack.c.l.b16 %v73
    %v418 = vunpack.c.l.b16 %v74
    %v419 = vunpack.c.l.b16 %v75
    %v420 = vunpack.c.l.b16 %v76
    %v421 = vunpack.c.l.b16 %v77
    %v422 = vunpack.c.l.b16 %v78
    %v423 = vunpack.c.l.b16 %v79
    %v424 = vunpack.c.l.b16 %v80
    %v425 = vunpack.c.l.b16 %v81
    %v426 = vunpack.c.l.b16 %v82
    %v427 = vunpack.c.l.b16 %v83
    %v428 = vunpack.c.l.b16 %v84
    %v429 = vunpack.c.l.b16 %v85
    %v430 = vunpack.c.l.b16 %v86
    %v431 = vunpack.c.l.b16 %v87
    %v432 = vunpack.c.l.b16 %v88
    %v433 = vunpack.c.l.b16 %v89
    %v434 = vunpack.c.l.b16 %v90
    %v435 = vunpack.c.l.b16 %v91
    %v436 = vunpack.c.l.b16 %v92
    %v437 = vunpack.c.l.b16 %v93
    %v438 = vunpack.c.l.b16 %v94
    %v439 = vunpack.c.l.b16 %v95
    %v440 = vunpack.c.l.b16 %v96
    %v441 = vunpack.c.l.b16 %v97
    %v442 = vunpack.c.l.b16 %v98
    %v443 = vunpack.c.l.b16 %v99
    %v444 = vunpack.c.l.b16 %v100
    %v445 = vunpack.c.l.b16 %v101
    %v446 = vunpack.c.l.b16 %v102
    %v447 = vunpack.c.l.b16 %v103
    %v448 = vunpack.c.l.b16 %v104
    %v449 = vunpack.c.l.b16 %v105
    %v450 = vunpack.c.l.b16 %v106
    %v451 = vunpack.c.l.b16 %v107
    %v452 = vunpack.c.l.b16 %v108
    %v453 = vunpack.c.l.b16 %v109
    %v454 = vunpack.c.l.b16 %v110
    %v455 = vunpack.c.l.b16 %v111
    %v456 = vunpack.c.l.b16 %v112
    %v457 = vunpack.c.l.b16 %v113
    %v458 = vunpack.c.l.b16 %v114
    %v459 = vunpack.c.l.b16 %v115
    %v460 = vunpack.c.l.b16 %v116
    %v461 = vunpack.c.l.b16 %v117
    %v462 = vunpack.c.l.b16 %v118
    %v463 = vunpack.c.l.b16 %v119
    %v464 = vunpack.c.l.b16 %v120
    %v465 = vunpack.c.l.b16 %v121
    %v466 = vunpack.c.l.b16 %v122
    %v467 = vunpack.c.l.b16 %v123
    %v468 = vunpack.c.l.b16 %v124
    %v469 = vunpack.c.l.b16 %v125
    %v470 = vunpack.c.l.b16 %v126
    %v471 = vunpack.c.l.b16 %v127
    %v472 = vunpack.c.l.b16 %v128
    %v473 = vunpack.c.l.b16 %v129
    %v474 = vunpack.c.l.b16 %v130
    %v475 = vunpack.c.l.b16 %v131
    %v476 = vunpack.c.l.b16 %v132
    %v477 = vunpack.c.l.b16 %v133
    %v478 = vunpack.c.l.b16 %v134
    %v479 = vunpack.c.l.b16 %v135
    %v480 = vunpack.c.l.b16 %v136
    %v481 = vunpack.c.l.b16 %v137
    %v482 = vunpack.c.l.b16 %v138
    %v483 = vunpack.c.l.b16 %v139
    %v484 = vunpack.c.l.b16 %v140
    %v485 = vunpack.c.l.b16 %v141
    %v486 = vunpack.c.l.b16 %v142
    %v487 = vunpack.c.l.b16 %v143
    %v488 = vunpack.c.l.b16 %v144
    %v489 = vunpack.c.l.b16 %v145
    %v490 = vunpack.c.l.b16 %v146
    %v491 = vunpack.c.l.b16 %v147
    %v492 = vunpack.c.l.b16 %v148
    %v493 = vunpack.c.l.b16 %v149
    %v494 = vunpack.c.l.b16 %v150
    %v495 = vunpack.c.l.b16 %v151
    %v496 = vunpack.c.l.b16 %v152
    %v497 = vunpack.c.l.b16 %v153
    %v498 = vunpack.c.l.b16 %v154
    %v499 = vunpack.c.l.b16 %v155
    %v500 = vunpack.c.l.b16 %v156
    %v501 = vunpack.c.l.b16 %v157
    %v502 = vunpack.c.l.b16 %v158
    %v503 = vunpack.c.l.b16 %v159
    %v504 = vunpack.c.l.b16 %v160
    %v505 = vunpack.c.l.b16 %v161
    %v506 = vunpack.c.l.b16 %v162
    %v507 = vpack.c.b16 %v380, %v379
    %v508 = vpack.c.b16 %v382, %v381
    %v509 = vpack.c.b16 %v384, %v383
    %v510 = vpack.c.b16 %v386, %v385
    %v511 = vpack.c.b16 %v388, %v387
    %v512 = vpack.c.b16 %v390, %v389
    %v513 = vpack.c.b16 %v392, %v391
    %v514 = vpack.c.b16 %v394, %v393
    %v515 = vpack.c.b16 %v396, %v395
    %v516 = vpack.c.b16 %v398, %v397
    %v517 = vpack.c.b16 %v400, %v399
    %v518 = vpack.c.b16 %v402, %v401
    %v519 = vpack.c.b16 %v404, %v403
    %v520 = vpack.c.b16 %v406, %v405
    %v521 = vpack.c.b16 %v408, %v407
    %v522 = vpack.c.b16 %v410, %v409
    %v523 = vpack.c.b16 %v412, %v411
    %v524 = vpack.c.b16 %v414, %v413
    %v525 = vpack.c.b16 %v416, %v415
    %v526 = vpack.c.b16 %v418, %v417
    %v527 = vpack.c.b16 %v420, %v419
    %v528 = vpack.c.b16 %v422, %v421
    %v529 = vpack.c.b16 %v424, %v423
    %v530 = vpack.c.b16 %v426, %v425
    %v531 = vpack.c.b16 %v428, %v427
    %v532 = vpack.c.b16 %v430, %v429
    %v533 = vpack.c.b16 %v432, %v431
    %v534 = vpack.c.b16 %v434, %v433
    %v535 = vpack.c.b16 %v436, %v435
    %v536 = vpack.c.b16 %v438, %v437
    %v537 = vpack.c.b16 %v440, %v439
    %v538 = vpack.c.b16 %v442, %v441
    %v539 = vpack.c.b16 %v444, %v443
    %v540 = vpack.c.b16 %v446, %v445
    %v541 = vpack.c.b16 %v448, %v447
    %v542 = vpack.c.b16 %v450, %v449
    %v543 = vpack.c.b16 %v452, %v451
    %v544 = vpack.c.b16 %v454, %v453
    %v545 = vpack.c.b16 %v456, %v455
    %v546 = vpack.c.b16 %v458, %v457
    %v547 = vpack.c.b16 %v460, %v459
    %v548 = vpack.c.b16 %v462, %v461
    %v549 = vpack.c.b16 %v464, %v463
    %v550 = vpack.c.b16 %v466, %v465
    %v551 = vpack.c.b16 %v468, %v467
    %v552 = vpack.c.b16 %v470, %v469
    %v553 = vpack.c.b16 %v472, %v471
    %v554 = vpack.c.b16 %v474, %v473
    %v555 = vpack.c.b16 %v476, %v475
    %v556 = vpack.c.b16 %v478, %v477
    %v557 = vpack.c.b16 %v480, %v479
    %v558 = vpack.c.b16 %v482, %v481
    %v559 = vpack.c.b16 %v484, %v483
    %v560 = vpack.c.b16 %v486, %v485
    %v561 = vpack.c.b16 %v488, %v487
    %v562 = vpack.c.b16 %v490, %v489
    %v563 = vpack.c.b16 %v492, %v491
    %v564 = vpack.c.b16 %v494, %v493
    %v565 = vpack.c.b16 %v496, %v495
    %v566 = vpack.c.b16 %v498, %v497
    %v567 = vpack.c.b16 %v500, %v499
    %v568 = vpack.c.b16 %v502, %v501
    %v569 = vpack.c.b16 %v504, %v503
    %v570 = vpack.c.b16 %v506, %v505
    %635 = vmatprep.subr.bf16.mxu0 0
    %636 = vmatpush1.bf16.msra.mxu0 %v507
    %637 = vmatprep.subr.bf16.mxu0 0
    %638 = vmatpush1.bf16.msra.mxu0 %v508
    %639 = vmatprep.subr.bf16.mxu0 0
    %640 = vmatpush1.bf16.msra.mxu0 %v509
    %641 = vmatprep.subr.bf16.mxu0 0
    %642 = vmatpush1.bf16.msra.mxu0 %v510
    %643 = vmatprep.subr.bf16.mxu0 0
    %644 = vmatpush1.bf16.msra.mxu0 %v511
    %645 = vmatprep.subr.bf16.mxu0 0
    %646 = vmatpush1.bf16.msra.mxu0 %v512
    %647 = vmatprep.subr.bf16.mxu0 0
    %648 = vmatpush1.bf16.msra.mxu0 %v513
    %649 = vmatprep.subr.bf16.mxu0 0
    %650 = vmatpush1.bf16.msra.mxu0 %v514
    %651 = vmatprep.subr.bf16.mxu0 0
    %652 = vmatpush1.bf16.msra.mxu0 %v515
    %653 = vmatprep.subr.bf16.mxu0 0
    %654 = vmatpush1.bf16.msra.mxu0 %v516
    %655 = vmatprep.subr.bf16.mxu0 0
    %656 = vmatpush1.bf16.msra.mxu0 %v517
    %657 = vmatprep.subr.bf16.mxu0 0
    %658 = vmatpush1.bf16.msra.mxu0 %v518
    %659 = vmatprep.subr.bf16.mxu0 0
    %660 = vmatpush1.bf16.msra.mxu0 %v519
    %661 = vmatprep.subr.bf16.mxu0 0
    %662 = vmatpush1.bf16.msra.mxu0 %v520
    %663 = vmatprep.subr.bf16.mxu0 0
    %664 = vmatpush1.bf16.msra.mxu0 %v521
    %665 = vmatprep.subr.bf16.mxu0 0
    %666 = vmatpush1.bf16.msra.mxu0 %v522
    %667 = vmatprep.mubr.f32.mxu0 %v204
    %668 = vmatmul.mubr.f32.gmra.mrb[0].mxu0 %v203
    %v669 = vpop.f32.mrb[0].mxu0
    %v670 = vadd.f32 0.0, %v669
    %v671 = vpop.f32.mrb[0].mxu0
    %672 = vdwg.mxu0
    %673 = vmatprep.subr.bf16.mxu0 0
    %674 = vmatpush1.bf16.msra.mxu0 %v523
    %675 = vmatprep.subr.bf16.mxu0 0
    %676 = vmatpush1.bf16.msra.mxu0 %v524
    %677 = vmatprep.subr.bf16.mxu0 0
    %678 = vmatpush1.bf16.msra.mxu0 %v525
    %679 = vmatprep.subr.bf16.mxu0 0
    %680 = vmatpush1.bf16.msra.mxu0 %v526
    %681 = vmatprep.subr.bf16.mxu0 0
    %682 = vmatpush1.bf16.msra.mxu0 %v527
    %683 = vmatprep.subr.bf16.mxu0 0
    %684 = vmatpush1.bf16.msra.mxu0 %v528
    %685 = vmatprep.subr.bf16.mxu0 0
    %686 = vmatpush1.bf16.msra.mxu0 %v529
    %687 = vmatprep.subr.bf16.mxu0 0
    %688 = vmatpush1.bf16.msra.mxu0 %v530
    %689 = vmatprep.subr.bf16.mxu0 0
    %690 = vmatpush1.bf16.msra.mxu0 %v531
    %691 = vmatprep.subr.bf16.mxu0 0
    %692 = vmatpush1.bf16.msra.mxu0 %v532
    %693 = vmatprep.subr.bf16.mxu0 0
    %694 = vmatpush1.bf16.msra.mxu0 %v533
    %695 = vmatprep.subr.bf16.mxu0 0
    %696 = vmatpush1.bf16.msra.mxu0 %v534
    %697 = vmatprep.subr.bf16.mxu0 0
    %698 = vmatpush1.bf16.msra.mxu0 %v535
    %699 = vmatprep.subr.bf16.mxu0 0
    %700 = vmatpush1.bf16.msra.mxu0 %v536
    %701 = vmatprep.subr.bf16.mxu0 0
    %702 = vmatpush1.bf16.msra.mxu0 %v537
    %703 = vmatprep.subr.bf16.mxu0 0
    %704 = vmatpush1.bf16.msra.mxu0 %v538
    %705 = vmatprep.mubr.f32.mxu0 %v206
    %706 = vmatmul.mubr.f32.gmra.mrb[0].mxu0 %v205
    %v707 = vpop.f32.mrb[0].mxu0
    %v708 = vadd.f32 %v670, %v707
    %v709 = vpop.f32.mrb[0].mxu0
    %710 = vdwg.mxu0
    %711 = vmatprep.subr.bf16.mxu0 0
    %712 = vmatpush1.bf16.msra.mxu0 %v539
    %713 = vmatprep.subr.bf16.mxu0 0
    %714 = vmatpush1.bf16.msra.mxu0 %v540
    %715 = vmatprep.subr.bf16.mxu0 0
    %716 = vmatpush1.bf16.msra.mxu0 %v541
    %717 = vmatprep.subr.bf16.mxu0 0
    %718 = vmatpush1.bf16.msra.mxu0 %v542
    %719 = vmatprep.subr.bf16.mxu0 0
    %720 = vmatpush1.bf16.msra.mxu0 %v543
    %721 = vmatprep.subr.bf16.mxu0 0
    %722 = vmatpush1.bf16.msra.mxu0 %v544
    %723 = vmatprep.subr.bf16.mxu0 0
    %724 = vmatpush1.bf16.msra.mxu0 %v545
    %725 = vmatprep.subr.bf16.mxu0 0
    %726 = vmatpush1.bf16.msra.mxu0 %v546
    %727 = vmatprep.subr.bf16.mxu0 0
    %728 = vmatpush1.bf16.msra.mxu0 %v547
    %729 = vmatprep.subr.bf16.mxu0 0
    %730 = vmatpush1.bf16.msra.mxu0 %v548
    %731 = vmatprep.subr.bf16.mxu0 0
    %732 = vmatpush1.bf16.msra.mxu0 %v549
    %733 = vmatprep.subr.bf16.mxu0 0
    %734 = vmatpush1.bf16.msra.mxu0 %v550
    %735 = vmatprep.subr.bf16.mxu0 0
    %736 = vmatpush1.bf16.msra.mxu0 %v551
    %737 = vmatprep.subr.bf16.mxu0 0
    %738 = vmatpush1.bf16.msra.mxu0 %v552
    %739 = vmatprep.subr.bf16.mxu0 0
    %740 = vmatpush1.bf16.msra.mxu0 %v553
    %741 = vmatprep.subr.bf16.mxu0 0
    %742 = vmatpush1.bf16.msra.mxu0 %v554
    %743 = vmatprep.mubr.f32.mxu0 %v240
    %744 = vmatmul.mubr.f32.gmra.mrb[0].mxu0 %v239
    %v745 = vpop.f32.mrb[0].mxu0
    %v746 = vadd.f32 %v708, %v745
    %v747 = vpop.f32.mrb[0].mxu0
    %748 = vdwg.mxu0
    %749 = vmatprep.subr.bf16.mxu0 0
    %750 = vmatpush1.bf16.msra.mxu0 %v555
    %751 = vmatprep.subr.bf16.mxu0 0
    %752 = vmatpush1.bf16.msra.mxu0 %v556
    %753 = vmatprep.subr.bf16.mxu0 0
    %754 = vmatpush1.bf16.msra.mxu0 %v557
    %755 = vmatprep.subr.bf16.mxu0 0
    %756 = vmatpush1.bf16.msra.mxu0 %v558
    %757 = vmatprep.subr.bf16.mxu0 0
    %758 = vmatpush1.bf16.msra.mxu0 %v559
    %759 = vmatprep.subr.bf16.mxu0 0
    %760 = vmatpush1.bf16.msra.mxu0 %v560
    %761 = vmatprep.subr.bf16.mxu0 0
    %762 = vmatpush1.bf16.msra.mxu0 %v561
    %763 = vmatprep.subr.bf16.mxu0 0
    %764 = vmatpush1.bf16.msra.mxu0 %v562
    %765 = vmatprep.subr.bf16.mxu0 0
    %766 = vmatpush1.bf16.msra.mxu0 %v563
    %767 = vmatprep.subr.bf16.mxu0 0
    %768 = vmatpush1.bf16.msra.mxu0 %v564
    %769 = vmatprep.subr.bf16.mxu0 0
    %770 = vmatpush1.bf16.msra.mxu0 %v565
    %771 = vmatprep.subr.bf16.mxu0 0
    %772 = vmatpush1.bf16.msra.mxu0 %v566
    %773 = vmatprep.subr.bf16.mxu0 0
    %774 = vmatpush1.bf16.msra.mxu0 %v567
    %775 = vmatprep.subr.bf16.mxu0 0
    %776 = vmatpush1.bf16.msra.mxu0 %v568
    %777 = vmatprep.subr.bf16.mxu0 0
    %778 = vmatpush1.bf16.msra.mxu0 %v569
    %779 = vmatprep.subr.bf16.mxu0 0
    %780 = vmatpush1.bf16.msra.mxu0 %v570
    %781 = vmatprep.mubr.f32.mxu0 %v242
    %782 = vmatmul.mubr.f32.gmra.mrb[0].mxu0 %v241
    %v783 = vpop.f32.mrb[0].mxu0
    %v784 = vadd.f32 %v746, %v783
    %v785 = vpop.f32.mrb[0].mxu0
    %786 = vdwg.mxu0
    %v787 = vadd.f32 %v26, %v784
    %vm788 = vcmask 23552
    %789 = vst.msk [vmem:[#allocation2] sm:$0xff] %vm788, %v787
    // Predicated region
    $region22: #{tpu_custom_call.1} parent=1 // pred_check
      %p790 = pneg %p20
    $region23: #{tpu_custom_call.1} parent=1 // pred_check_branch
      %792 = sbr.rel (%p790) target = $region25
    $region24: #{tpu_custom_call.1} parent=1 // pred_region
      %v793 = vld [vmem:[#allocation2] sm:$0xff]
      %v794 = vld [vmem:[%s2] sm:$0x7]
      %s795 = sld [smem:[#allocation3]]
      %v796 = vstv %s795
      %v798 = vsel %vm788, %v793, 0
      %vm800 = vcmask 1042432
      %v802 = vsel %vm800, %v794, 0
      %804 = vmatprep.subr.mxu0 0.0
      %805 = vmatpush1.msra.mxu0 %v802
      %806 = vmatprep.subr.mxu0 0.0
      %807 = vmatpush1.msra.mxu0 0.0
      %808 = vmatprep.subr.mxu0 0.0
      %809 = vmatpush1.msra.mxu0 0.0
      %810 = vmatprep.subr.mxu0 0.0
      %811 = vmatpush1.msra.mxu0 0.0
      %812 = vmatprep.subr.mxu0 0.0
      %813 = vmatpush1.msra.mxu0 0.0
      %814 = vmatprep.subr.mxu0 0.0
      %815 = vmatpush1.msra.mxu0 0.0
      %816 = vmatprep.subr.mxu0 0.0
      %817 = vmatpush1.msra.mxu0 0.0
      %818 = vmatprep.subr.mxu0 0.0
      %819 = vmatpush1.msra.mxu0 0.0
      %820 = vmatprep.subr.mxu0 0.0
      %821 = vmatpush1.msra.mxu0 0.0
      %822 = vmatprep.subr.mxu0 0.0
      %823 = vmatpush1.msra.mxu0 0.0
      %824 = vmatprep.subr.mxu0 0.0
      %825 = vmatpush1.msra.mxu0 0.0
      %826 = vmatprep.subr.mxu0 0.0
      %827 = vmatpush1.msra.mxu0 0.0
      %828 = vmatprep.subr.mxu0 0.0
      %829 = vmatpush1.msra.mxu0 0.0
      %830 = vmatprep.subr.mxu0 0.0
      %831 = vmatpush1.msra.mxu0 0.0
      %832 = vmatprep.subr.mxu0 0.0
      %833 = vmatpush1.msra.mxu0 0.0
      %834 = vmatprep.subr.mxu0 0.0
      %835 = vmatpush1.msra.mxu0 0.0
      %836 = vmatprep.subr.mxu0 0.0
      %837 = vmatpush1.msra.mxu0 0.0
      %838 = vmatprep.subr.mxu0 0.0
      %839 = vmatpush1.msra.mxu0 0.0
      %840 = vmatprep.subr.mxu0 0.0
      %841 = vmatpush1.msra.mxu0 0.0
      %842 = vmatprep.subr.mxu0 0.0
      %843 = vmatpush1.msra.mxu0 0.0
      %844 = vmatprep.subr.mxu0 0.0
      %845 = vmatpush1.msra.mxu0 0.0
      %846 = vmatprep.subr.mxu0 0.0
      %847 = vmatpush1.msra.mxu0 0.0
      %848 = vmatprep.subr.mxu0 0.0
      %849 = vmatpush1.msra.mxu0 0.0
      %850 = vmatprep.subr.mxu0 0.0
      %851 = vmatpush1.msra.mxu0 0.0
      %852 = vmatprep.subr.mxu0 0.0
      %853 = vmatpush1.msra.mxu0 0.0
      %854 = vmatprep.subr.mxu0 0.0
      %855 = vmatpush1.msra.mxu0 0.0
      %856 = vmatprep.subr.mxu0 0.0
      %857 = vmatpush1.msra.mxu0 0.0
      %858 = vmatprep.subr.mxu0 0.0
      %859 = vmatpush1.msra.mxu0 0.0
      %860 = vmatprep.subr.mxu0 0.0
      %861 = vmatpush1.msra.mxu0 0.0
      %862 = vmatprep.subr.mxu0 0.0
      %863 = vmatpush1.msra.mxu0 0.0
      %864 = vmatprep.subr.mxu0 0.0
      %865 = vmatpush1.msra.mxu0 0.0
      %866 = vmatprep.subr.mxu0 0.0
      %867 = vmatpush1.msra.mxu0 0.0
      %868 = vmatprep.mubr.f32.mxu0 0.0
      %869 = vmatmul.mubr.f32.gmra.mrb[0].mxu0 %v798
      %v870 = vpop.f32.mrb[0].mxu0
      %v871 = vadd.f32 %v796, %v870
      %v872 = vpop.f32.mrb[0].mxu0
      %873 = vdwg.mxu0
      %vm874 = vcmask 80896
      %875 = vst.msk [vmem:[#allocation4] sm:$0xff] %vm874, %v871
    $region25: #{tpu_custom_call.1} parent=1 // pred_fallthru
      _
    // Predicated region
    $region26: #{tpu_custom_call.1} parent=1 // pred_check
      _
    $region27: #{tpu_custom_call.1} parent=1 // pred_check_branch
      %877 = sbr.rel (0) target = $region29
    $region28: #{tpu_custom_call.1} parent=1 // pred_region
      %s879 = ssub.s32 128, 32
      %880 = vsyncadd [#allocation5], %s879
      %s881 = sshll.u32 [#allocation4], 4
      %s882 = int_to_ptr.vmem [resolvable:$true] %s881
      %887 = dma.vmem_to_hbm [thread:$0]  %s882, 32, %s4, [#allocation5], 32, 32, 2
    $region29: #{tpu_custom_call.1} parent=1 // pred_fallthru
      _
    // Predicated region
    $region30: #{tpu_custom_call.1} parent=1 // pred_check
      _
    $region31: #{tpu_custom_call.1} parent=1 // pred_check_branch
      %889 = sbr.rel (0) target = $region33
    $region32: #{tpu_custom_call.1} parent=1 // pred_region
      %890 = dma.done [#allocation5], 128
    $region33: #{tpu_custom_call.1} parent=1 // pred_fallthru
      _
    %891 = vsyncpa [#allocation5], 1

</llo_original>
